<compile_context>
chip_gen: v6e
topology: v6e:2x2x1
jax: 0.10.0
libtpu: 0.0.40
codegen_flags: <defaults>
</compile_context>

<pallas_src>
import functools
import numpy as np
import jax
import jax.numpy as jnp
from jax.experimental import pallas as pl
from jax.experimental.pallas import tpu as pltpu

NEG_INF = -1e10
VMEM_LIMIT = 48 * 1024 * 1024     # headroom under v7x's 64 MiB physical VMEM
TM_MAX = 512                      # rows per grid step for the fused matmul kernels


def _round_up(x, m):
    return ((x + m - 1) // m) * m


# ----------------------------- Pallas kernels ------------------------------

def _fused_mm_kernel(*refs, n_mm, activation, scale, has_residual, has_ln, eps):
    """matmul [+relu+matmul] + bias [+scale] [+residual] [+LayerNorm] epilogue.

    Ref order: x, w1, b1, [w2, b2], [residual], [gamma, beta], out.
    Matmul inputs are bf16 (MXU); accumulation + all elementwise math in f32.
    """
    out_ref = refs[-1]
    it = iter(refs[:-1])
    x = next(it)[...]
    w1 = next(it)[...]
    b1 = next(it)[...]
    y = jnp.dot(x, w1, preferred_element_type=jnp.float32) + b1
    if n_mm == 2:
        h = jnp.maximum(y, 0.0).astype(w1.dtype)            # relu between the layers
        w2 = next(it)[...]
        b2 = next(it)[...]
        y = jnp.dot(h, w2, preferred_element_type=jnp.float32) + b2
    elif activation == "relu":
        y = jnp.maximum(y, 0.0)
    if scale != 1.0:
        y = y * scale
    if has_residual:
        y = y + next(it)[...]
    if has_ln:
        g = next(it)[...]
        bb = next(it)[...]
        mu = jnp.mean(y, axis=-1, keepdims=True)
        var = jnp.mean((y - mu) ** 2, axis=-1, keepdims=True)
        y = (y - mu) * jax.lax.rsqrt(var + eps) * g + bb
    out_ref[...] = y


def fused_linear(x, w1, b1, *, w2=None, b2=None, activation=None, scale=1.0,
                 residual=None, ln=None, eps=1e-5):
    """y = [LN]( [residual +] scale * ( act(x@w1+b1) [@w2 + b2] ) ).

    x / residual / out are tiled over M (<=512 rows, parallel grid axis so both
    v7x TensorCores are used); weights / biases / LN params stay VMEM-resident.
    """
    K = x.shape[-1]
    lead = x.shape[:-1]
    M = int(np.prod(lead)) if lead else 1
    n_mm = 2 if w2 is not None else 1
    N = int(w2.shape[1]) if n_mm == 2 else int(w1.shape[1])

    x2 = x.reshape(M, K)
    r2 = None if residual is None else residual.reshape(M, N).astype(jnp.float32)
    if M > TM_MAX:
        Mp, tm = _round_up(M, TM_MAX), TM_MAX
        x2 = jnp.pad(x2, ((0, Mp - M), (0, 0)))
        if r2 is not None:
            r2 = jnp.pad(r2, ((0, Mp - M), (0, 0)))
    else:
        Mp, tm = M, M
    grid = (Mp // tm,)

    def resident(shape):
        return pl.BlockSpec(shape, lambda i: (0,) * len(shape))

    inputs = [x2.astype(jnp.bfloat16),
              w1.astype(jnp.bfloat16),
              b1.reshape(1, -1).astype(jnp.float32)]
    in_specs = [pl.BlockSpec((tm, K), lambda i: (i, 0)),
                resident(tuple(int(s) for s in w1.shape)),
                resident((1, int(w1.shape[1])))]
    if n_mm == 2:
        inputs += [w2.astype(jnp.bfloat16), b2.reshape(1, -1).astype(jnp.float32)]
        in_specs += [resident(tuple(int(s) for s in w2.shape)), resident((1, N))]
    has_residual = r2 is not None
    if has_residual:
        inputs.append(r2)
        in_specs.append(pl.BlockSpec((tm, N), lambda i: (i, 0)))
    has_ln = ln is not None
    if has_ln:
        g, bb = ln
        inputs += [g.reshape(1, N).astype(jnp.float32),
                   bb.reshape(1, N).astype(jnp.float32)]
        in_specs += [resident((1, N)), resident((1, N))]

    out = pl.pallas_call(
        functools.partial(_fused_mm_kernel, n_mm=n_mm, activation=activation,
                          scale=float(scale), has_residual=has_residual,
                          has_ln=has_ln, eps=eps),
        out_shape=jax.ShapeDtypeStruct((Mp, N), jnp.float32),
        grid=grid,
        in_specs=in_specs,
        out_specs=pl.BlockSpec((tm, N), lambda i: (i, 0)),
        compiler_params=pltpu.CompilerParams(
            dimension_semantics=("parallel",),
            vmem_limit_bytes=VMEM_LIMIT),
    )(*inputs)
    if Mp != M:
        out = out[:M]
    return out.reshape(lead + (N,))


def _attn_kernel(q_ref, k_ref, v_ref, bias_ref, *out_refs, inv_scale, with_probs):
    q = q_ref[...]                                   # (H, Lq, D) bf16
    k = k_ref[...]                                   # (H, Lk, D) bf16
    v = v_ref[...]                                   # (H, Lk, D) bf16
    s = jnp.einsum('hqd,hkd->hqk', q, k,
                   preferred_element_type=jnp.float32) * inv_scale
    s = s + bias_ref[...]                            # additive mask bias (Lq, Lk)
    m = jnp.max(s, axis=-1, keepdims=True)
    p = jnp.exp(s - m)
    denom = jnp.sum(p, axis=-1, keepdims=True)
    attn = p * pl.reciprocal(denom, approx=True)     # EUP reciprocal, VALU stays free
    out_refs[0][...] = jnp.einsum('hqk,hkd->hqd', attn.astype(v.dtype), v,
                                  preferred_element_type=jnp.float32)
    if with_probs:
        out_refs[1][...] = attn


def scaled_dot_attention(Q, K, V, bias, head_dim, need_attn=False):
    """Q,K,V: (B,H,L,D); bias: (B,1,Lq,Lk) additive f32 mask (0 / -1e10)."""
    B, H, Lq, D = Q.shape
    Lk = K.shape[2]
    in_specs = [
        pl.BlockSpec((None, H, Lq, D), lambda b: (b, 0, 0, 0)),
        pl.BlockSpec((None, H, Lk, D), lambda b: (b, 0, 0, 0)),
        pl.BlockSpec((None, H, Lk, D), lambda b: (b, 0, 0, 0)),
        pl.BlockSpec((None, None, Lq, Lk), lambda b: (b, 0, 0, 0)),
    ]
    o_shape = jax.ShapeDtypeStruct((B, H, Lq, D), jnp.float32)
    o_spec = pl.BlockSpec((None, H, Lq, D), lambda b: (b, 0, 0, 0))
    kern = functools.partial(_attn_kernel, inv_scale=1.0 / float(np.sqrt(head_dim)),
                             with_probs=need_attn)
    cp = pltpu.CompilerParams(dimension_semantics=("parallel",),
                              vmem_limit_bytes=VMEM_LIMIT)
    args = (Q.astype(jnp.bfloat16), K.astype(jnp.bfloat16),
            V.astype(jnp.bfloat16), bias.astype(jnp.float32))
    if need_attn:
        a_shape = jax.ShapeDtypeStruct((B, H, Lq, Lk), jnp.float32)
        a_spec = pl.BlockSpec((None, H, Lq, Lk), lambda b: (b, 0, 0, 0))
        out, attn = pl.pallas_call(kern, out_shape=(o_shape, a_shape), grid=(B,),
                                   in_specs=in_specs, out_specs=(o_spec, a_spec),
                                   compiler_params=cp)(*args)
        return out, attn
    out = pl.pallas_call(kern, out_shape=o_shape, grid=(B,),
                         in_specs=in_specs, out_specs=o_spec,
                         compiler_params=cp)(*args)
    return out, None


# ------------------------------ model blocks -------------------------------

def mask_to_bias(mask, Lq):
    """bool mask (B,1,1|Lq,Lk) -> additive f32 bias (B,1,Lq,Lk) of 0 / -1e10."""
    B = mask.shape[0]
    Lk = mask.shape[-1]
    m = jnp.broadcast_to(mask, (B, 1, Lq, Lk))
    return jnp.where(m, 0.0, NEG_INF).astype(jnp.float32)


def multi_head_attention(p, query, key_value, bias, *, is_self, need_attn=False):
    n_heads = p['n_heads']
    hid = query.shape[-1]
    hd = hid // n_heads
    B, Lq, _ = query.shape
    Lk = key_value.shape[1]
    if is_self:
        qkv = fused_linear(query, p['w_qkv'], p['b_qkv'])        # one matmul for Q|K|V
        Q, K, V = qkv[..., :hid], qkv[..., hid:2 * hid], qkv[..., 2 * hid:]
    else:
        Q = fused_linear(query, p['w_q'], p['b_q'])
        kv = fused_linear(key_value, p['w_kv'], p['b_kv'])       # one matmul for K|V
        K, V = kv[..., :hid], kv[..., hid:]
    Qh = Q.reshape(B, Lq, n_heads, hd).transpose(0, 2, 1, 3)
    Kh = K.reshape(B, Lk, n_heads, hd).transpose(0, 2, 1, 3)
    Vh = V.reshape(B, Lk, n_heads, hd).transpose(0, 2, 1, 3)
    out, attn = scaled_dot_attention(Qh, Kh, Vh, bias, hd, need_attn=need_attn)
    ctx = out.transpose(0, 2, 1, 3).reshape(B, Lq, hid)
    # fc_o is fused with residual + LayerNorm by the caller.
    return ctx, attn


def encoder_layer(p, src, bias):
    ctx, _ = multi_head_attention(p['attn'], src, src, bias, is_self=True)
    src = fused_linear(ctx, p['attn']['o']['w'], p['attn']['o']['b'],
                       residual=src, ln=(p['ln1']['g'], p['ln1']['b']))
    src = fused_linear(src, p['pff']['fc1']['w'], p['pff']['fc1']['b'],
                       w2=p['pff']['fc2']['w'], b2=p['pff']['fc2']['b'],
                       residual=src, ln=(p['ln2']['g'], p['ln2']['b']))
    return src


def encoder(p, src, src_mask):
    bias = mask_to_bias(src_mask, src.shape[1])
    for lp in p['layers']:
        src = encoder_layer(lp, src, bias)
    return fused_linear(src, p['fc_out']['w'], p['fc_out']['b'])


def decoder_layer(p, trg, enc_src, trg_bias, src_bias, need_attn):
    ctx, _ = multi_head_attention(p['self_attn'], trg, trg, trg_bias, is_self=True)
    trg = fused_linear(ctx, p['self_attn']['o']['w'], p['self_attn']['o']['b'],
                       residual=trg, ln=(p['ln1']['g'], p['ln1']['b']))
    ctx, attention = multi_head_attention(p['enc_attn'], trg, enc_src, src_bias,
                                          is_self=False, need_attn=need_attn)
    trg = fused_linear(ctx, p['enc_attn']['o']['w'], p['enc_attn']['o']['b'],
                       residual=trg, ln=(p['ln2']['g'], p['ln2']['b']))
    trg = fused_linear(trg, p['pff']['fc1']['w'], p['pff']['fc1']['b'],
                       w2=p['pff']['fc2']['w'], b2=p['pff']['fc2']['b'],
                       residual=trg, ln=(p['ln3']['g'], p['ln3']['b']))
    return trg, attention


def decoder(p, trg, enc_src, trg_mask, src_mask, batch_mol_tor):
    bmt = jnp.pad(batch_mol_tor, ((0, 0), (1, 0), (0, 0)))           # F.pad front of seq
    emb = fused_linear(trg, p['tok']['w'], p['tok']['b'], scale=1.5)  # tok_emb * 3 / 2
    x = jnp.concatenate([emb, bmt / 2.0], axis=-1)
    Lt = x.shape[1]
    trg_bias = mask_to_bias(trg_mask, Lt)
    src_bias = mask_to_bias(src_mask, Lt)
    attention = None
    nl = len(p['layers'])
    for li, lp in enumerate(p['layers']):
        x, attention = decoder_layer(lp, x, enc_src, trg_bias, src_bias,
                                     need_attn=(li == nl - 1))
    return x, attention            # fc_out is fused with the top-level LayerNorm(4)


def make_pos_fwd(p, x):
    return fused_linear(x, p['fc1']['w'], p['fc1']['b'],
                        w2=p['fc2']['w'], b2=p['fc2']['b'], scale=4.0)


def make_pos_emb_fwd(p, idx):
    x = jnp.take(p['emb'], idx, axis=0)
    return fused_linear(x, p['fc1']['w'], p['fc1']['b'],
                        w2=p['fc2']['w'], b2=p['fc2']['b'], scale=4.0)


def make_src_mask_atoms(num_atom_list, max_num_atom):
    m = jnp.arange(max_num_atom)[None, :] < jnp.array(num_atom_list)[:, None]
    return m[:, None, None, :]


def make_seq2seq_masks(angle_group_num):
    L = max(angle_group_num)
    a = jnp.array(angle_group_num)
    src_mask = (jnp.arange(L)[None, :] < a[:, None])[:, None, None, :]
    src_mask_ = (jnp.arange(L + 1)[None, :] < (a[:, None] + 1))[:, None, None, :]
    tril = jnp.tril(jnp.ones((L + 1, L + 1), dtype=bool))
    trg_mask = src_mask_ & tril[None, None, :, :]
    return src_mask, trg_mask


# ----------------------------- full forward --------------------------------

def posemb_seq2seq_forward(params, cfg, atom_feat, AM_bond_feat, node_color_feat, d,
                           labels, masks, relativeenergys, num_atom_list,
                           angle_group_num, num_confs_list, noise_key):
    B = atom_feat.shape[0]
    mna = cfg['max_num_atom']

    AM_flat = AM_bond_feat.reshape(B, -1).astype(jnp.float32)
    pos = make_pos_fwd(params['make_pos'], AM_flat).reshape(B, mna, -1)
    pos = pos + make_pos_emb_fwd(params['make_pos_wl'], node_color_feat)
    pos = pos + make_pos_emb_fwd(params['make_pos_d'], d)

    atom_feat_pos = jnp.concatenate([atom_feat, pos], axis=-1)
    src_mask_atoms = make_src_mask_atoms(num_atom_list, mna)
    atom_feat_pos_ = encoder(params['t_e_encoder'], atom_feat_pos, src_mask_atoms)

    # ---- vectorized torsion-pair feature gather (was a Python double loop) ----
    # TODO(synk): RDKit graph-neighbor averaging (get_one_bond_nei / average_atoms /
    # average_edges over SMILES) has no Pallas/array equivalent; bond-endpoint
    # features are used as stand-ins.
    max_angle = max(angle_group_num)
    a1 = np.zeros((B, max_angle), np.int32)
    a2 = np.zeros((B, max_angle), np.int32)
    valid = np.zeros((B, max_angle), np.float32)
    for i, pairs in enumerate(masks):
        for j, (x1, x2) in enumerate(pairs):
            a1[i, j], a2[i, j], valid[i, j] = x1, x2, 1.0
    a1 = jnp.asarray(a1)
    a2 = jnp.asarray(a2)
    validj = jnp.asarray(valid)[..., None]
    bidx = jnp.arange(B)[:, None]
    f1 = atom_feat_pos_[bidx, a1]                                   # (B, A, nf+od)
    f2 = atom_feat_pos_[bidx, a2]
    tor_atom_pos = jnp.concatenate([f1, f2, f1, f1], axis=-1)
    e = AM_bond_feat[bidx, a1, a2].astype(jnp.float32)              # (B, A, efd)
    tor_edge = jnp.concatenate([e, e, e], axis=-1)
    batch_mol_tor_feat = jnp.concatenate([tor_atom_pos, tor_edge], axis=-1) * validj
    p1 = pos[bidx, a1]
    p2 = pos[bidx, a2]
    batch_mol_tor = jnp.concatenate([p1, p2, p1, p1], axis=-1) * validj

    reps = np.array(num_confs_list)
    batch_mol_tor_feat = jnp.repeat(batch_mol_tor_feat, reps, axis=0)
    batch_mol_tor = jnp.repeat(batch_mol_tor, reps, axis=0)
    angle_group_num_rep = []
    for i, n in enumerate(num_confs_list):
        angle_group_num_rep.extend([angle_group_num[i]] * n)

    noise = cfg['noise_loc'] + cfg['noise_scale'] * jax.random.normal(
        noise_key, batch_mol_tor_feat.shape[:-1] + (cfg['noise_dim'],), jnp.float32)
    src = jnp.concatenate([batch_mol_tor_feat, noise], axis=-1)

    re = relativeenergys
    trg = jnp.concatenate([jnp.stack([re, re], axis=1)[:, None, :], labels], axis=1)
    extra = jnp.tile((re / 5.0 - 0.5)[:, None], (1, trg.shape[1]))[..., None]
    trg = jnp.concatenate([trg, extra], axis=-1)                    # (N, L+1, 3)

    src_mask, trg_mask = make_seq2seq_masks(angle_group_num_rep)
    enc_src = encoder(params['encoder'], src, src_mask)
    hidden, attention = decoder(params['decoder'], trg, enc_src, trg_mask, src_mask,
                                batch_mol_tor)
    # decoder fc_out fused with the final LayerNorm(4)
    pred = fused_linear(hidden, params['decoder']['fc_out']['w'],
                        params['decoder']['fc_out']['b'],
                        ln=(params['final_ln']['g'], params['final_ln']['b']))
    pred = pred[:, :-1, :]
    return pred, attention


# --------------------------- parameter init --------------------------------

class KeyGen:
    def __init__(self, seed):
        self._key = jax.random.PRNGKey(seed)

    def __call__(self):
        self._key, sub = jax.random.split(self._key)
        return sub


def init_linear(kg, in_dim, out_dim):
    lim = 1.0 / np.sqrt(in_dim)
    return {'w': jax.random.uniform(kg(), (in_dim, out_dim), jnp.float32, -lim, lim),
            'b': jax.random.uniform(kg(), (out_dim,), jnp.float32, -lim, lim)}


def init_ln(dim):
    return {'g': jnp.ones((dim,), jnp.float32), 'b': jnp.zeros((dim,), jnp.float32)}


def init_mha(kg, hid, n_heads):
    q = init_linear(kg, hid, hid)
    k = init_linear(kg, hid, hid)
    v = init_linear(kg, hid, hid)
    return {'w_qkv': jnp.concatenate([q['w'], k['w'], v['w']], axis=1),
            'b_qkv': jnp.concatenate([q['b'], k['b'], v['b']]),
            'w_q': q['w'], 'b_q': q['b'],
            'w_kv': jnp.concatenate([k['w'], v['w']], axis=1),
            'b_kv': jnp.concatenate([k['b'], v['b']]),
            'o': init_linear(kg, hid, hid),
            'n_heads': n_heads}


def init_enc_layer(kg, hid, n_heads, pf):
    return {'attn': init_mha(kg, hid, n_heads), 'ln1': init_ln(hid),
            'pff': {'fc1': init_linear(kg, hid, pf), 'fc2': init_linear(kg, pf, hid)},
            'ln2': init_ln(hid)}


def init_encoder(kg, hid, n_layers, n_heads, pf, out_dim):
    return {'layers': [init_enc_layer(kg, hid, n_heads, pf) for _ in range(n_layers)],
            'fc_out': init_linear(kg, hid, out_dim)}


def init_dec_layer(kg, hid, n_heads, pf):
    return {'self_attn': init_mha(kg, hid, n_heads), 'ln1': init_ln(hid),
            'enc_attn': init_mha(kg, hid, n_heads), 'ln2': init_ln(hid),
            'pff': {'fc1': init_linear(kg, hid, pf), 'fc2': init_linear(kg, pf, hid)},
            'ln3': init_ln(hid)}


def init_decoder(kg, trg_emb_dim, outp_dim, n_layers, n_heads, pf, out_dim):
    hid = trg_emb_dim + 4 * outp_dim
    return {'tok': init_linear(kg, 3, trg_emb_dim),
            'layers': [init_dec_layer(kg, hid, n_heads, pf) for _ in range(n_layers)],
            'fc_out': init_linear(kg, hid, out_dim)}


# ---------------------------------- main ------------------------------------

if __name__ == "__main__":
    cfg = dict(max_num_atom=8, node_feat_dim=16, edge_feat_dim=8, outp_dim=4,
               noise_dim=8, noise_loc=0.0, noise_scale=1.0, trg_emb_dim=8,
               pf_dim_pos=32, pf_dim1=16, pf_dim2=32, max_Emb_wl=10, max_Emb_d=10)
    mna, nfd = cfg['max_num_atom'], cfg['node_feat_dim']
    efd, od = cfg['edge_feat_dim'], cfg['outp_dim']
    DIM = 4 * (nfd + od) + 3 * efd + cfg['noise_dim']               # 112

    kg = KeyGen(0)
    params = {
        'make_pos': {'fc1': init_linear(kg, mna * mna * efd, cfg['pf_dim_pos']),
                     'fc2': init_linear(kg, cfg['pf_dim_pos'], od * mna)},
        'make_pos_wl': {'emb': jax.random.normal(kg(), (cfg['max_Emb_wl'], cfg['pf_dim1']), jnp.float32),
                        'fc1': init_linear(kg, cfg['pf_dim1'], cfg['pf_dim2']),
                        'fc2': init_linear(kg, cfg['pf_dim2'], od)},
        'make_pos_d': {'emb': jax.random.normal(kg(), (cfg['max_Emb_d'], cfg['pf_dim1']), jnp.float32),
                       'fc1': init_linear(kg, cfg['pf_dim1'], cfg['pf_dim2']),
                       'fc2': init_linear(kg, cfg['pf_dim2'], od)},
        't_e_encoder': init_encoder(kg, nfd + od, 1, 2, 32, nfd + od),
        'encoder': init_encoder(kg, DIM, 1, 4, 32, 4 * od + cfg['trg_emb_dim']),
        'decoder': init_decoder(kg, cfg['trg_emb_dim'], od, 1, 4, 32, 4),
        'final_ln': init_ln(4),
    }

    data_key = jax.random.PRNGKey(0)
    k1, k2, k3, k4, k5, k6, knoise = jax.random.split(data_key, 7)

    B = 2
    num_atom_list = [6, 8]
    masks = [[(0, 1), (1, 2)], [(0, 1), (2, 3), (3, 4)]]            # torsion bond atom pairs
    angle_group_num = [len(m) for m in masks]                       # [2, 3]
    num_confs_list = [2, 1]
    total_confs = sum(num_confs_list)                               # 3
    max_angle = max(angle_group_num)                                # 3

    atom_feat = jax.random.normal(k1, (B, mna, nfd), jnp.float32)
    AM_bond_feat = jax.random.normal(k2, (B, mna, mna, efd), jnp.float32)
    node_color_feat = jax.random.randint(k3, (B, mna), 0, cfg['max_Emb_wl'])
    d = jax.random.randint(k4, (B, mna), 0, cfg['max_Emb_d'])
    labels = jax.random.normal(k5, (total_confs, max_angle, 2), jnp.float32)
    relativeenergys = jax.random.uniform(k6, (total_confs,), jnp.float32, 0.0, 5.0)

    prediction, attention = posemb_seq2seq_forward(
        params, cfg, atom_feat, AM_bond_feat, node_color_feat, d, labels, masks,
        relativeenergys, num_atom_list, angle_group_num, num_confs_list, knoise)

    jax.block_until_ready(prediction)
    jax.block_until_ready(attention)
    assert prediction.shape == (total_confs, max_angle, 4), prediction.shape
    assert attention.shape == (total_confs, 4, max_angle + 1, max_angle), attention.shape
    print("KERNEL_OK")
</pallas_src>

<mosaic_0001>
module attributes {stable_mosaic.version = 11 : i64} {
  func.func @_fused_mm_kernel(%arg0: i32, %arg1: memref<2x512xbf16, #tpu.memory_space<vmem>>, %arg2: memref<512x32xbf16, #tpu.memory_space<vmem>>, %arg3: memref<1x32xf32, #tpu.memory_space<vmem>>, %arg4: memref<32x32xbf16, #tpu.memory_space<vmem>>, %arg5: memref<1x32xf32, #tpu.memory_space<vmem>>, %arg6: memref<2x32xf32, #tpu.memory_space<vmem>>) attributes {dimension_semantics = [#tpu.dimension_semantics<parallel>], iteration_bounds = array<i64: 1>, scalar_prefetch = 0 : i64, scratch_operands = 0 : i64, tpu.core_type = #tpu.core_type<tc>, window_params = [{transform_indices = @transform_0, window_bounds = array<i64: 2, 512>}, {pipeline_mode = #tpu.pipeline_mode<synchronous>, transform_indices = @transform_1, window_bounds = array<i64: 512, 32>}, {pipeline_mode = #tpu.pipeline_mode<synchronous>, transform_indices = @transform_2, window_bounds = array<i64: 1, 32>}, {pipeline_mode = #tpu.pipeline_mode<synchronous>, transform_indices = @transform_3, window_bounds = array<i64: 32, 32>}, {pipeline_mode = #tpu.pipeline_mode<synchronous>, transform_indices = @transform_4, window_bounds = array<i64: 1, 32>}, {transform_indices = @transform_5, window_bounds = array<i64: 2, 32>}]} {
    %c0 = arith.constant 0 : index
    %c0_0 = arith.constant 0 : index
    %0 = vector.load %arg1[%c0, %c0_0] : memref<2x512xbf16, #tpu.memory_space<vmem>>, vector<2x512xbf16>
    %c0_1 = arith.constant 0 : index
    %c0_2 = arith.constant 0 : index
    %1 = vector.load %arg2[%c0_1, %c0_2] : memref<512x32xbf16, #tpu.memory_space<vmem>>, vector<512x32xbf16>
    %c0_3 = arith.constant 0 : index
    %c0_4 = arith.constant 0 : index
    %2 = vector.load %arg3[%c0_3, %c0_4] : memref<1x32xf32, #tpu.memory_space<vmem>>, vector<1x32xf32>
    %cst = arith.constant dense<0.000000e+00> : vector<2x32xf32>
    %3 = tpu.matmul %0, %1, %cst {dimension_numbers = #tpu.dot_dimension_numbers<[1], [0], [0], [1], [0, 0, 1, 1], [], []>} : vector<2x512xbf16>, vector<512x32xbf16>, vector<2x32xf32> -> vector<2x32xf32>
    %4 = vector.broadcast %2 : vector<1x32xf32> to vector<2x32xf32>
    %5 = arith.addf %3, %4 : vector<2x32xf32>
    %cst_5 = arith.constant 0.000000e+00 : f32
    %6 = vector.broadcast %cst_5 : f32 to vector<2x32xf32>
    %7 = arith.maximumf %5, %6 : vector<2x32xf32>
    %8 = arith.truncf %7 : vector<2x32xf32> to vector<2x32xbf16>
    %c0_6 = arith.constant 0 : index
    %c0_7 = arith.constant 0 : index
    %9 = vector.load %arg4[%c0_6, %c0_7] : memref<32x32xbf16, #tpu.memory_space<vmem>>, vector<32x32xbf16>
    %c0_8 = arith.constant 0 : index
    %c0_9 = arith.constant 0 : index
    %10 = vector.load %arg5[%c0_8, %c0_9] : memref<1x32xf32, #tpu.memory_space<vmem>>, vector<1x32xf32>
    %cst_10 = arith.constant dense<0.000000e+00> : vector<2x32xf32>
    %11 = tpu.matmul %8, %9, %cst_10 {dimension_numbers = #tpu.dot_dimension_numbers<[1], [0], [0], [1], [0, 0, 1, 1], [], []>} : vector<2x32xbf16>, vector<32x32xbf16>, vector<2x32xf32> -> vector<2x32xf32>
    %12 = vector.broadcast %10 : vector<1x32xf32> to vector<2x32xf32>
    %13 = arith.addf %11, %12 : vector<2x32xf32>
    %cst_11 = arith.constant 4.000000e+00 : f32
    %14 = vector.broadcast %cst_11 : f32 to vector<2x32xf32>
    %15 = arith.mulf %13, %14 : vector<2x32xf32>
    %c0_12 = arith.constant 0 : index
    %c0_13 = arith.constant 0 : index
    %16 = vector.load %arg6[%c0_12, %c0_13] : memref<2x32xf32, #tpu.memory_space<vmem>>, vector<2x32xf32>
    tpu.vector_store %arg6[%c0_12, %c0_13], %15 {strides = array<i32>} : memref<2x32xf32, #tpu.memory_space<vmem>>, vector<2x32xf32>,
    return
  }
  func.func @transform_0(%arg0: i32) -> (i32, i32) {
    %c0_i32 = arith.constant 0 : i32
    %c0_i32_0 = arith.constant 0 : i32
    return %arg0, %c0_i32 : i32, i32
  }
  func.func @transform_1(%arg0: i32) -> (i32, i32) {
    %c0_i32 = arith.constant 0 : i32
    %c0_i32_0 = arith.constant 0 : i32
    %c0_i32_1 = arith.constant 0 : i32
    return %c0_i32, %c0_i32_0 : i32, i32
  }
  func.func @transform_2(%arg0: i32) -> (i32, i32) {
    %c0_i32 = arith.constant 0 : i32
    %c0_i32_0 = arith.constant 0 : i32
    %c0_i32_1 = arith.constant 0 : i32
    return %c0_i32, %c0_i32_0 : i32, i32
  }
  func.func @transform_3(%arg0: i32) -> (i32, i32) {
    %c0_i32 = arith.constant 0 : i32
    %c0_i32_0 = arith.constant 0 : i32
    %c0_i32_1 = arith.constant 0 : i32
    return %c0_i32, %c0_i32_0 : i32, i32
  }
  func.func @transform_4(%arg0: i32) -> (i32, i32) {
    %c0_i32 = arith.constant 0 : i32
    %c0_i32_0 = arith.constant 0 : i32
    %c0_i32_1 = arith.constant 0 : i32
    return %c0_i32, %c0_i32_0 : i32, i32
  }
  func.func @transform_5(%arg0: i32) -> (i32, i32) {
    %c0_i32 = arith.constant 0 : i32
    %c0_i32_0 = arith.constant 0 : i32
    return %arg0, %c0_i32 : i32, i32
  }
}

</mosaic_0001>

<llo_original>
// kernel: tpu_custom_call.1
$region0: #{tpu_custom_call.1}
  #allocation0 [shape = 'u32[]', space=smem, size = 0x4, offset = 0x4, fixed_abs, tag = 'smem constant byte address 0x4 - core index']
  #allocation1 [shape = 'u32[144,128]{1,0:T(1,128)}', space=vmem, size = 0x12000, scoped, tag = 'internal scratch']
  %s0 = inlined_call_operand.vmem [shape: bf16[2,512], index: 0, kind: input, shape index: {}]
  %s1 = inlined_call_operand.vmem [shape: bf16[512,32], index: 1, kind: input, shape index: {}]
  %s2 = inlined_call_operand.vmem [shape: f32[1,32], index: 2, kind: input, shape index: {}]
  %s3 = inlined_call_operand.vmem [shape: bf16[32,32], index: 3, kind: input, shape index: {}]
  %s4 = inlined_call_operand.vmem [shape: f32[1,32], index: 4, kind: input, shape index: {}]
  %s5 = inlined_call_operand.hbm [shape: f32[2,32], index: 5, kind: output, shape index: {}]
  %s6 = sld [smem:[#allocation0]]
  $region30: #{tpu_custom_call.1} parent=0
    _
  %s8 = ssub.s32 1, %s6
  %s9 = scalar_select 0, %s8, %s6
  $region1: #{tpu_custom_call.1} parent=0
    #allocation2 [shape = 'u8[1024]{0}', space=vmem, size = 0x400, scoped, tag = 'output window, operand 0, single buffered']
    #allocation3 [shape = 's32[1]{0}', space=sflag, size = 0x4, scoped, tag = 'scoped memory for tpu_custom_call.1']
    %10 = vsyncpa [#allocation3], 0
    // Predicated region
    $region2: #{tpu_custom_call.1} parent=1 // pred_check
      _
    $region3: #{tpu_custom_call.1} parent=1 // pred_check_branch
      %12 = sbr.rel (0) target = $region5
    $region4: #{tpu_custom_call.1} parent=1 // pred_region
      _
    $region5: #{tpu_custom_call.1} parent=1 // pred_fallthru
      _
    // Predicated region
    $region6: #{tpu_custom_call.1} parent=1 // pred_check
      _
    $region7: #{tpu_custom_call.1} parent=1 // pred_check_branch
      %14 = sbr.rel (0) target = $region9
    $region8: #{tpu_custom_call.1} parent=1 // pred_region
      _
    $region9: #{tpu_custom_call.1} parent=1 // pred_fallthru
      _
    // Predicated region
    $region10: #{tpu_custom_call.1} parent=1 // pred_check
      _
    $region11: #{tpu_custom_call.1} parent=1 // pred_check_branch
      %16 = sbr.rel (0) target = $region13
    $region12: #{tpu_custom_call.1} parent=1 // pred_region
      _
    $region13: #{tpu_custom_call.1} parent=1 // pred_fallthru
      _
    // Predicated region
    $region14: #{tpu_custom_call.1} parent=1 // pred_check
      _
    $region15: #{tpu_custom_call.1} parent=1 // pred_check_branch
      %18 = sbr.rel (0) target = $region17
    $region16: #{tpu_custom_call.1} parent=1 // pred_region
      _
    $region17: #{tpu_custom_call.1} parent=1 // pred_fallthru
      _
    // Predicated region
    $region18: #{tpu_custom_call.1} parent=1 // pred_check
      _
    $region19: #{tpu_custom_call.1} parent=1 // pred_check_branch
      %20 = sbr.rel (0) target = $region21
    $region20: #{tpu_custom_call.1} parent=1 // pred_region
      _
    $region21: #{tpu_custom_call.1} parent=1 // pred_fallthru
      _
    %v22 = vld [vmem:[%s0] sm:$0xf]
    %v23 = vld [vmem:[%s1] sm:$0xf]
    %v24 = vld [vmem:[%s1 + $0x4] sm:$0xf]
    %v25 = vld [vmem:[%s1 + $0x8] sm:$0xf]
    %v26 = vld [vmem:[%s1 + $0xc] sm:$0xf]
    %v27 = vld [vmem:[%s1 + $0x10] sm:$0xf]
    %v28 = vld [vmem:[%s1 + $0x14] sm:$0xf]
    %v29 = vld [vmem:[%s1 + $0x18] sm:$0xf]
    %v30 = vld [vmem:[%s1 + $0x1c] sm:$0xf]
    %v31 = vld [vmem:[%s1 + $0x20] sm:$0xf]
    %v32 = vld [vmem:[%s1 + $0x24] sm:$0xf]
    %v33 = vld [vmem:[%s1 + $0x28] sm:$0xf]
    %v34 = vld [vmem:[%s1 + $0x2c] sm:$0xf]
    %v35 = vld [vmem:[%s1 + $0x30] sm:$0xf]
    %v36 = vld [vmem:[%s1 + $0x34] sm:$0xf]
    %v37 = vld [vmem:[%s1 + $0x38] sm:$0xf]
    %v38 = vld [vmem:[%s1 + $0x3c] sm:$0xf]
    %v39 = vld [vmem:[%s1 + $0x40] sm:$0xf]
    %v40 = vld [vmem:[%s1 + $0x44] sm:$0xf]
    %v41 = vld [vmem:[%s1 + $0x48] sm:$0xf]
    %v42 = vld [vmem:[%s1 + $0x4c] sm:$0xf]
    %v43 = vld [vmem:[%s1 + $0x50] sm:$0xf]
    %v44 = vld [vmem:[%s1 + $0x54] sm:$0xf]
    %v45 = vld [vmem:[%s1 + $0x58] sm:$0xf]
    %v46 = vld [vmem:[%s1 + $0x5c] sm:$0xf]
    %v47 = vld [vmem:[%s1 + $0x60] sm:$0xf]
    %v48 = vld [vmem:[%s1 + $0x64] sm:$0xf]
    %v49 = vld [vmem:[%s1 + $0x68] sm:$0xf]
    %v50 = vld [vmem:[%s1 + $0x6c] sm:$0xf]
    %v51 = vld [vmem:[%s1 + $0x70] sm:$0xf]
    %v52 = vld [vmem:[%s1 + $0x74] sm:$0xf]
    %v53 = vld [vmem:[%s1 + $0x78] sm:$0xf]
    %v54 = vld [vmem:[%s1 + $0x7c] sm:$0xf]
    %v55 = vld [vmem:[%s1 + $0x80] sm:$0xf]
    %v56 = vld [vmem:[%s1 + $0x84] sm:$0xf]
    %v57 = vld [vmem:[%s1 + $0x88] sm:$0xf]
    %v58 = vld [vmem:[%s1 + $0x8c] sm:$0xf]
    %v59 = vld [vmem:[%s1 + $0x90] sm:$0xf]
    %v60 = vld [vmem:[%s1 + $0x94] sm:$0xf]
    %v61 = vld [vmem:[%s1 + $0x98] sm:$0xf]
    %v62 = vld [vmem:[%s1 + $0x9c] sm:$0xf]
    %v63 = vld [vmem:[%s1 + $0xa0] sm:$0xf]
    %v64 = vld [vmem:[%s1 + $0xa4] sm:$0xf]
    %v65 = vld [vmem:[%s1 + $0xa8] sm:$0xf]
    %v66 = vld [vmem:[%s1 + $0xac] sm:$0xf]
    %v67 = vld [vmem:[%s1 + $0xb0] sm:$0xf]
    %v68 = vld [vmem:[%s1 + $0xb4] sm:$0xf]
    %v69 = vld [vmem:[%s1 + $0xb8] sm:$0xf]
    %v70 = vld [vmem:[%s1 + $0xbc] sm:$0xf]
    %v71 = vld [vmem:[%s1 + $0xc0] sm:$0xf]
    %v72 = vld [vmem:[%s1 + $0xc4] sm:$0xf]
    %v73 = vld [vmem:[%s1 + $0xc8] sm:$0xf]
    %v74 = vld [vmem:[%s1 + $0xcc] sm:$0xf]
    %v75 = vld [vmem:[%s1 + $0xd0] sm:$0xf]
    %v76 = vld [vmem:[%s1 + $0xd4] sm:$0xf]
    %v77 = vld [vmem:[%s1 + $0xd8] sm:$0xf]
    %v78 = vld [vmem:[%s1 + $0xdc] sm:$0xf]
    %v79 = vld [vmem:[%s1 + $0xe0] sm:$0xf]
    %v80 = vld [vmem:[%s1 + $0xe4] sm:$0xf]
    %v81 = vld [vmem:[%s1 + $0xe8] sm:$0xf]
    %v82 = vld [vmem:[%s1 + $0xec] sm:$0xf]
    %v83 = vld [vmem:[%s1 + $0xf0] sm:$0xf]
    %v84 = vld [vmem:[%s1 + $0xf4] sm:$0xf]
    %v85 = vld [vmem:[%s1 + $0xf8] sm:$0xf]
    %v86 = vld [vmem:[%s1 + $0xfc] sm:$0xf]
    %v87 = vld [vmem:[%s2] sm:$0x1]
    %v89 = vlaneseq
    %v90 = vshrl.u32 %v89, 7
    %v91 = vsub.s32 0, %v90
    %v92 = vrot.slane %v87, %v91
    %v96 = vunpack.c.l.s4 1966171168
    %v97 = vunpack.c.0.s8 %v96
    %v98 = vlaneseq
    %v99 = vshrl.u32 %v98, 7
    %v100 = vsub.s32 %v97, %v99
    %v101 = vrot.slane %v22, %v100
    %v102 = vcombine.high %v101, %v101
    %v104 = vunpack.c.l.s4 1966171168
    %v105 = vunpack.c.0.s8 %v104
    %v106 = vlaneseq
    %v107 = vshrl.u32 %v106, 7
    %v108 = vsub.s32 %v105, %v107
    %v109 = vrot.slane %v101, %v108
    %v111 = vunpack.c.l.s4 1966171168
    %v112 = vunpack.c.0.s8 %v111
    %v113 = vlaneseq
    %v114 = vshrl.u32 %v113, 7
    %v115 = vsub.s32 %v112, %v114
    %v116 = vrot.slane %v102, %v115
    %v117 = vcombine.high %v109, %v109
    %v118 = vcombine.high %v116, %v116
    %v187 = vunpack.c.l.b16 %v23
    %v188 = vunpack.c.l.b16 %v24
    %v189 = vunpack.c.l.b16 %v25
    %v190 = vunpack.c.l.b16 %v26
    %v191 = vunpack.c.l.b16 %v27
    %v192 = vunpack.c.l.b16 %v28
    %v193 = vunpack.c.l.b16 %v29
    %v194 = vunpack.c.l.b16 %v30
    %v195 = vunpack.c.l.b16 %v31
    %v196 = vunpack.c.l.b16 %v32
    %v197 = vunpack.c.l.b16 %v33
    %v198 = vunpack.c.l.b16 %v34
    %v199 = vunpack.c.l.b16 %v35
    %v200 = vunpack.c.l.b16 %v36
    %v201 = vunpack.c.l.b16 %v37
    %v202 = vunpack.c.l.b16 %v38
    %v203 = vunpack.c.l.b16 %v39
    %v204 = vunpack.c.l.b16 %v40
    %v205 = vunpack.c.l.b16 %v41
    %v206 = vunpack.c.l.b16 %v42
    %v207 = vunpack.c.l.b16 %v43
    %v208 = vunpack.c.l.b16 %v44
    %v209 = vunpack.c.l.b16 %v45
    %v210 = vunpack.c.l.b16 %v46
    %v211 = vunpack.c.l.b16 %v47
    %v212 = vunpack.c.l.b16 %v48
    %v213 = vunpack.c.l.b16 %v49
    %v214 = vunpack.c.l.b16 %v50
    %v215 = vunpack.c.l.b16 %v51
    %v216 = vunpack.c.l.b16 %v52
    %v217 = vunpack.c.l.b16 %v53
    %v218 = vunpack.c.l.b16 %v54
    %v219 = vunpack.c.l.b16 %v55
    %v220 = vunpack.c.l.b16 %v56
    %v221 = vunpack.c.l.b16 %v57
    %v222 = vunpack.c.l.b16 %v58
    %v223 = vunpack.c.l.b16 %v59
    %v224 = vunpack.c.l.b16 %v60
    %v225 = vunpack.c.l.b16 %v61
    %v226 = vunpack.c.l.b16 %v62
    %v227 = vunpack.c.l.b16 %v63
    %v228 = vunpack.c.l.b16 %v64
    %v229 = vunpack.c.l.b16 %v65
    %v230 = vunpack.c.l.b16 %v66
    %v231 = vunpack.c.l.b16 %v67
    %v232 = vunpack.c.l.b16 %v68
    %v233 = vunpack.c.l.b16 %v69
    %v234 = vunpack.c.l.b16 %v70
    %v235 = vunpack.c.l.b16 %v71
    %v236 = vunpack.c.l.b16 %v72
    %v237 = vunpack.c.l.b16 %v73
    %v238 = vunpack.c.l.b16 %v74
    %v239 = vunpack.c.l.b16 %v75
    %v240 = vunpack.c.l.b16 %v76
    %v241 = vunpack.c.l.b16 %v77
    %v242 = vunpack.c.l.b16 %v78
    %v243 = vunpack.c.l.b16 %v79
    %v244 = vunpack.c.l.b16 %v80
    %v245 = vunpack.c.l.b16 %v81
    %v246 = vunpack.c.l.b16 %v82
    %v247 = vunpack.c.l.b16 %v83
    %v248 = vunpack.c.l.b16 %v84
    %v249 = vunpack.c.l.b16 %v85
    %v250 = vunpack.c.l.b16 %v86
    %v251 = vpack.c.b16 %v188, %v187
    %v252 = vpack.c.b16 %v190, %v189
    %v253 = vpack.c.b16 %v192, %v191
    %v254 = vpack.c.b16 %v194, %v193
    %v255 = vpack.c.b16 %v196, %v195
    %v256 = vpack.c.b16 %v198, %v197
    %v257 = vpack.c.b16 %v200, %v199
    %v258 = vpack.c.b16 %v202, %v201
    %v259 = vpack.c.b16 %v204, %v203
    %v260 = vpack.c.b16 %v206, %v205
    %v261 = vpack.c.b16 %v208, %v207
    %v262 = vpack.c.b16 %v210, %v209
    %v263 = vpack.c.b16 %v212, %v211
    %v264 = vpack.c.b16 %v214, %v213
    %v265 = vpack.c.b16 %v216, %v215
    %v266 = vpack.c.b16 %v218, %v217
    %v267 = vpack.c.b16 %v220, %v219
    %v268 = vpack.c.b16 %v222, %v221
    %v269 = vpack.c.b16 %v224, %v223
    %v270 = vpack.c.b16 %v226, %v225
    %v271 = vpack.c.b16 %v228, %v227
    %v272 = vpack.c.b16 %v230, %v229
    %v273 = vpack.c.b16 %v232, %v231
    %v274 = vpack.c.b16 %v234, %v233
    %v275 = vpack.c.b16 %v236, %v235
    %v276 = vpack.c.b16 %v238, %v237
    %v277 = vpack.c.b16 %v240, %v239
    %v278 = vpack.c.b16 %v242, %v241
    %v279 = vpack.c.b16 %v244, %v243
    %v280 = vpack.c.b16 %v246, %v245
    %v281 = vpack.c.b16 %v248, %v247
    %v282 = vpack.c.b16 %v250, %v249
    %315 = vmatprep.subr.bf16.mxu0 0
    %316 = vmatpush1.bf16.msra.mxu0 %v258
    %317 = vmatprep.subr.bf16.mxu0 0
    %318 = vmatpush1.bf16.msra.mxu0 %v257
    %319 = vmatprep.subr.bf16.mxu0 0
    %320 = vmatpush1.bf16.msra.mxu0 %v256
    %321 = vmatprep.subr.bf16.mxu0 0
    %322 = vmatpush1.bf16.msra.mxu0 %v255
    %323 = vmatprep.subr.bf16.mxu0 0
    %324 = vmatpush1.bf16.msra.mxu0 %v254
    %325 = vmatprep.subr.bf16.mxu0 0
    %326 = vmatpush1.bf16.msra.mxu0 %v253
    %327 = vmatprep.subr.bf16.mxu0 0
    %328 = vmatpush1.bf16.msra.mxu0 %v252
    %329 = vmatprep.subr.bf16.mxu0 0
    %330 = vmatpush1.bf16.msra.mxu0 %v251
    %331 = vmatprep.subr.bf16.mxu0 0
    %332 = vmatpush2.bf16.msra.mxu0 %v266
    %333 = vmatprep.subr.bf16.mxu0 0
    %334 = vmatpush2.bf16.msra.mxu0 %v265
    %335 = vmatprep.subr.bf16.mxu0 0
    %336 = vmatpush2.bf16.msra.mxu0 %v264
    %337 = vmatprep.subr.bf16.mxu0 0
    %338 = vmatpush2.bf16.msra.mxu0 %v263
    %339 = vmatprep.subr.bf16.mxu0 0
    %340 = vmatpush2.bf16.msra.mxu0 %v262
    %341 = vmatprep.subr.bf16.mxu0 0
    %342 = vmatpush2.bf16.msra.mxu0 %v261
    %343 = vmatprep.subr.bf16.mxu0 0
    %344 = vmatpush2.bf16.msra.mxu0 %v260
    %345 = vmatprep.subr.bf16.mxu0 0
    %346 = vmatpush2.bf16.msra.mxu0 %v259
    %347 = vmatprep.mubr.bf16.mxu0 %v116
    %348 = vmatmul.mubr.bf16.gmra.mxu0 %v109
    %v349 = vpop.f32.mrf.mxu0
    %v350 = vadd.f32 %v92, %v349
    %v351 = vpop.f32.mrf.mxu0
    %v352 = vpop.f32.mrf.mxu0
    %v353 = vpop.f32.mrf.mxu0
    %354 = vdwg.mxu0
    %355 = vmatprep.subr.bf16.mxu0 0
    %356 = vmatpush1.bf16.msra.mxu0 %v274
    %357 = vmatprep.subr.bf16.mxu0 0
    %358 = vmatpush1.bf16.msra.mxu0 %v273
    %359 = vmatprep.subr.bf16.mxu0 0
    %360 = vmatpush1.bf16.msra.mxu0 %v272
    %361 = vmatprep.subr.bf16.mxu0 0
    %362 = vmatpush1.bf16.msra.mxu0 %v271
    %363 = vmatprep.subr.bf16.mxu0 0
    %364 = vmatpush1.bf16.msra.mxu0 %v270
    %365 = vmatprep.subr.bf16.mxu0 0
    %366 = vmatpush1.bf16.msra.mxu0 %v269
    %367 = vmatprep.subr.bf16.mxu0 0
    %368 = vmatpush1.bf16.msra.mxu0 %v268
    %369 = vmatprep.subr.bf16.mxu0 0
    %370 = vmatpush1.bf16.msra.mxu0 %v267
    %371 = vmatprep.subr.bf16.mxu0 0
    %372 = vmatpush2.bf16.msra.mxu0 %v282
    %373 = vmatprep.subr.bf16.mxu0 0
    %374 = vmatpush2.bf16.msra.mxu0 %v281
    %375 = vmatprep.subr.bf16.mxu0 0
    %376 = vmatpush2.bf16.msra.mxu0 %v280
    %377 = vmatprep.subr.bf16.mxu0 0
    %378 = vmatpush2.bf16.msra.mxu0 %v279
    %379 = vmatprep.subr.bf16.mxu0 0
    %380 = vmatpush2.bf16.msra.mxu0 %v278
    %381 = vmatprep.subr.bf16.mxu0 0
    %382 = vmatpush2.bf16.msra.mxu0 %v277
    %383 = vmatprep.subr.bf16.mxu0 0
    %384 = vmatpush2.bf16.msra.mxu0 %v276
    %385 = vmatprep.subr.bf16.mxu0 0
    %386 = vmatpush2.bf16.msra.mxu0 %v275
    %387 = vmatprep.mubr.bf16.mxu0 %v118
    %388 = vmatmul.mubr.bf16.gmra.mxu0 %v117
    %v389 = vpop.f32.mrf.mxu0
    %v390 = vadd.f32 %v350, %v389
    %v391 = vpop.f32.mrf.mxu0
    %v392 = vpop.f32.mrf.mxu0
    %v393 = vpop.f32.mrf.mxu0
    %394 = vdwg.mxu0
    %v395 = vmax.f32 %v390, 0.0
    %v396 = vpack.c.bf16 %v395, %v395
    %v397 = vld [vmem:[%s3] sm:$0xf]
    %v398 = vld [vmem:[%s3 + $0x4] sm:$0xf]
    %v399 = vld [vmem:[%s3 + $0x8] sm:$0xf]
    %v400 = vld [vmem:[%s3 + $0xc] sm:$0xf]
    %v401 = vld [vmem:[%s4] sm:$0x1]
    %v403 = vlaneseq
    %v404 = vshrl.u32 %v403, 7
    %v405 = vsub.s32 0, %v404
    %v406 = vrot.slane %v401, %v405
    %v412 = vunpack.c.l.b16 %v397
    %v413 = vunpack.c.l.b16 %v398
    %v414 = vunpack.c.l.b16 %v399
    %v415 = vunpack.c.l.b16 %v400
    %v416 = vpack.c.b16 %v413, %v412
    %v417 = vpack.c.b16 %v415, %v414
    %vm420 = vcmask 261120
    %v422 = vsel %vm420, %v396, 0
    %424 = vmatprep.subr.bf16.mxu0 0
    %425 = vmatpush1.bf16.msra.mxu0 0
    %426 = vmatprep.subr.bf16.mxu0 0
    %427 = vmatpush1.bf16.msra.mxu0 0
    %428 = vmatprep.subr.bf16.mxu0 0
    %429 = vmatpush1.bf16.msra.mxu0 0
    %430 = vmatprep.subr.bf16.mxu0 0
    %431 = vmatpush1.bf16.msra.mxu0 0
    %432 = vmatprep.subr.bf16.mxu0 0
    %433 = vmatpush1.bf16.msra.mxu0 0
    %434 = vmatprep.subr.bf16.mxu0 0
    %435 = vmatpush1.bf16.msra.mxu0 0
    %436 = vmatprep.subr.bf16.mxu0 0
    %437 = vmatpush1.bf16.msra.mxu0 %v417
    %438 = vmatprep.subr.bf16.mxu0 0
    %439 = vmatpush1.bf16.msra.mxu0 %v416
    %440 = vmatprep.subr.bf16.mxu0 0
    %441 = vmatpush2.bf16.msra.mxu0 0
    %442 = vmatprep.subr.bf16.mxu0 0
    %443 = vmatpush2.bf16.msra.mxu0 0
    %444 = vmatprep.subr.bf16.mxu0 0
    %445 = vmatpush2.bf16.msra.mxu0 0
    %446 = vmatprep.subr.bf16.mxu0 0
    %447 = vmatpush2.bf16.msra.mxu0 0
    %448 = vmatprep.subr.bf16.mxu0 0
    %449 = vmatpush2.bf16.msra.mxu0 0
    %450 = vmatprep.subr.bf16.mxu0 0
    %451 = vmatpush2.bf16.msra.mxu0 0
    %452 = vmatprep.subr.bf16.mxu0 0
    %453 = vmatpush2.bf16.msra.mxu0 0
    %454 = vmatprep.subr.bf16.mxu0 0
    %455 = vmatpush2.bf16.msra.mxu0 0
    %456 = vmatprep.mubr.bf16.mxu0 0
    %457 = vmatmul.mubr.bf16.gmra.mxu0 %v422
    %v458 = vpop.f32.mrf.mxu0
    %v459 = vadd.f32 %v406, %v458
    %v460 = vpop.f32.mrf.mxu0
    %v461 = vpop.f32.mrf.mxu0
    %v462 = vpop.f32.mrf.mxu0
    %463 = vdwg.mxu0
    %v464 = vmul.f32 %v459, 4.0
    %vm465 = vcmask 254976
    %466 = vst.msk [vmem:[#allocation2] sm:$0x3] %vm465, %v464
    // Predicated region
    $region22: #{tpu_custom_call.1} parent=1 // pred_check
      _
    $region23: #{tpu_custom_call.1} parent=1 // pred_check_branch
      %468 = sbr.rel (0) target = $region25
    $region24: #{tpu_custom_call.1} parent=1 // pred_region
      %s470 = ssub.s32 32, 32
      %471 = vsyncadd [#allocation3], %s470
      %s473 = sshll.u32 [#allocation2], 4
      %s474 = int_to_ptr.vmem [resolvable:$true] %s473
      %476 = dma.vmem_to_hbm [thread:$0]  %s474, 32, %s5, [#allocation3]
    $region25: #{tpu_custom_call.1} parent=1 // pred_fallthru
      _
    // Predicated region
    $region26: #{tpu_custom_call.1} parent=1 // pred_check
      _
    $region27: #{tpu_custom_call.1} parent=1 // pred_check_branch
      %478 = sbr.rel (0) target = $region29
    $region28: #{tpu_custom_call.1} parent=1 // pred_region
      %479 = dma.done [#allocation3], 32
    $region29: #{tpu_custom_call.1} parent=1 // pred_fallthru
      _
    %480 = vsyncpa [#allocation3], 1

</llo_original>
